<compile_context>
chip_gen: v6e
topology: v6e:2x2x1
jax: 0.10.0
libtpu: 0.0.40
codegen_flags: <defaults>
</compile_context>

<pallas_src>
import math

import jax
import jax.numpy as jnp
from jax.experimental import pallas as pl
from jax.experimental.pallas import tpu as pltpu


def make_pos_embedding(emb_size: int, maxlen: int = 5000) -> jnp.ndarray:
    """Build the (maxlen, emb_size) sinusoidal table, matching the PyTorch buffer."""
    den = jnp.exp(-jnp.arange(0, emb_size, 2, dtype=jnp.float32)
                  * (math.log(10000.0) / emb_size))
    pos = jnp.arange(0, maxlen, dtype=jnp.float32)[:, None]
    pe = jnp.zeros((maxlen, emb_size), dtype=jnp.float32)
    pe = pe.at[:, 0::2].set(jnp.sin(pos * den))
    pe = pe.at[:, 1::2].set(jnp.cos(pos * den))
    return pe


def positional_encoding_forward(x, pos_embedding, *, dropout_p: float = 0.0,
                                seed: int = 0, tile_s: int = 512,
                                vmem_budget_bytes: int = 24 << 20):
    """x: (S, B, E) float32; pos_embedding: (maxlen, E) float32 -> (S, B, E)."""
    S, B, E = x.shape
    maxlen, E_pe = pos_embedding.shape
    assert E_pe == E, "pos_embedding emb_size mismatch"
    assert S <= maxlen, "sequence longer than maxlen"

    itemsize = jnp.dtype(x.dtype).itemsize
    # VMEM footprint per tile row: double-buffered x block + out block + pe block.
    per_row_bytes = (2 * 2 * B * E + 2 * E) * itemsize
    tile_cap = max(8, vmem_budget_bytes // per_row_bytes)
    s_ceil8 = ((S + 7) // 8) * 8           # no need to tile past the (padded) seq len
    tile = min(tile_s, tile_cap, s_ceil8)
    tile = max(8, (tile // 8) * 8)         # sublane multiple

    n_tiles = pl.cdiv(S, tile)
    S_pad = n_tiles * tile

    # Pad the ragged tail in the wrapper; padded rows are computed then dropped.
    x_p = x if S_pad == S else jnp.pad(x, ((0, S_pad - S), (0, 0), (0, 0)))
    pe_p = jnp.pad(pos_embedding[:S], ((0, S_pad - S), (0, 0)))

    # Lane-dense presentation: collapse (B, E) -> B*E on the minor axis.
    x_flat = x_p.reshape(S_pad, B * E)

    keep_scale = 1.0 / (1.0 - dropout_p) if dropout_p > 0.0 else 1.0
    if dropout_p > 0.0:
        drop_thresh = jnp.uint32(min(int(dropout_p * (2 ** 32)), 2 ** 32 - 1))

    def kernel(x_ref, pe_ref, o_ref):
        pe_tile = pe_ref[...]                                   # (tile, E)
        if B > 1:
            # Broadcast the positional row across the batch along the lane axis.
            pe_tile = jnp.concatenate([pe_tile] * B, axis=-1)   # (tile, B*E)
        out = x_ref[...] + pe_tile
        if dropout_p > 0.0:   # static Python branch; skipped entirely at eval
            pltpu.prng_seed(seed + pl.program_id(0))
            bits = pltpu.bitcast(pltpu.prng_random_bits(out.shape), jnp.uint32)
            keep = bits >= drop_thresh
            out = jnp.where(keep, out * keep_scale, jnp.zeros_like(out))
        o_ref[...] = out

    out_flat = pl.pallas_call(
        kernel,
        out_shape=jax.ShapeDtypeStruct((S_pad, B * E), x.dtype),
        grid_spec=pltpu.PrefetchScalarGridSpec(
            num_scalar_prefetch=0,
            grid=(n_tiles,),
            in_specs=[
                pl.BlockSpec((tile, B * E), lambda i: (i, 0)),  # token embeddings
                pl.BlockSpec((tile, E), lambda i: (i, 0)),      # positional table
            ],
            out_specs=pl.BlockSpec((tile, B * E), lambda i: (i, 0)),
        ),
        compiler_params=pltpu.CompilerParams(
            dimension_semantics=("parallel",),
            vmem_limit_bytes=48 * 1024 * 1024,
        ),
    )(x_flat, pe_p)

    return out_flat.reshape(S_pad, B, E)[:S]


if __name__ == "__main__":
    key = jax.random.PRNGKey(0)

    # (seq, batch, emb) layout, matching the PyTorch forward's broadcast over batch.
    S, B, E = 300, 4, 128          # S not a multiple of the tile -> exercises padding
    MAXLEN = 5000

    x = jax.random.normal(key, (S, B, E), dtype=jnp.float32)
    pe = make_pos_embedding(E, maxlen=MAXLEN)

    # dropout_p=0.0 == eval-mode dropout (identity), so the check is deterministic.
    out = positional_encoding_forward(x, pe, dropout_p=0.0, tile_s=128)
    out = jax.block_until_ready(out)

    # Plain-JAX reference of the forward semantics.
    ref = x + pe[:S][:, None, :]
    assert out.shape == (S, B, E)
    assert jnp.allclose(out, ref, atol=1e-5), "mismatch vs reference"

    print("KERNEL_OK")
</pallas_src>

<mosaic_0001>
module attributes {stable_mosaic.version = 11 : i64} {
  func.func @kernel(%arg0: i32, %arg1: memref<128x512xf32, #tpu.memory_space<vmem>>, %arg2: memref<128x128xf32, #tpu.memory_space<vmem>>, %arg3: memref<128x512xf32, #tpu.memory_space<vmem>>) attributes {dimension_semantics = [#tpu.dimension_semantics<parallel>], iteration_bounds = array<i64: 3>, scalar_prefetch = 0 : i64, scratch_operands = 0 : i64, tpu.core_type = #tpu.core_type<tc>, window_params = [{transform_indices = @transform_0, window_bounds = array<i64: 128, 512>}, {transform_indices = @transform_1, window_bounds = array<i64: 128, 128>}, {transform_indices = @transform_2, window_bounds = array<i64: 128, 512>}]} {
    %c0 = arith.constant 0 : index
    %c0_0 = arith.constant 0 : index
    %0 = vector.load %arg2[%c0, %c0_0] : memref<128x128xf32, #tpu.memory_space<vmem>>, vector<128x128xf32>
    %1 = tpu.concatenate %0, %0, %0, %0 in 1 : vector<128x128xf32>, vector<128x128xf32>, vector<128x128xf32>, vector<128x128xf32> -> vector<128x512xf32>
    %c0_1 = arith.constant 0 : index
    %c0_2 = arith.constant 0 : index
    %2 = vector.load %arg1[%c0_1, %c0_2] : memref<128x512xf32, #tpu.memory_space<vmem>>, vector<128x512xf32>
    %3 = arith.addf %2, %1 : vector<128x512xf32>
    %c0_3 = arith.constant 0 : index
    %c0_4 = arith.constant 0 : index
    %4 = vector.load %arg3[%c0_3, %c0_4] : memref<128x512xf32, #tpu.memory_space<vmem>>, vector<128x512xf32>
    tpu.vector_store %arg3[%c0_3, %c0_4], %3 {strides = array<i32>} : memref<128x512xf32, #tpu.memory_space<vmem>>, vector<128x512xf32>,
    return
  }
  func.func @transform_0(%arg0: i32) -> (i32, i32) {
    %c0_i32 = arith.constant 0 : i32
    %c0_i32_0 = arith.constant 0 : i32
    return %arg0, %c0_i32 : i32, i32
  }
  func.func @transform_1(%arg0: i32) -> (i32, i32) {
    %c0_i32 = arith.constant 0 : i32
    %c0_i32_0 = arith.constant 0 : i32
    return %arg0, %c0_i32 : i32, i32
  }
  func.func @transform_2(%arg0: i32) -> (i32, i32) {
    %c0_i32 = arith.constant 0 : i32
    %c0_i32_0 = arith.constant 0 : i32
    return %arg0, %c0_i32 : i32, i32
  }
}

</mosaic_0001>

<llo_original>
// kernel: tpu_custom_call.1
$region0: #{tpu_custom_call.1}
  #allocation0 [shape = 'u32[]', space=smem, size = 0x4, offset = 0x4, fixed_abs, tag = 'smem constant byte address 0x4 - core index']
  #allocation1 [shape = 'u32[144,128]{1,0:T(1,128)}', space=vmem, size = 0x12000, scoped, tag = 'internal scratch']
  %s0 = inlined_call_operand.hbm [shape: f32[384,512], index: 0, kind: input, shape index: {}]
  %s1 = inlined_call_operand.hbm [shape: f32[384,128], index: 1, kind: input, shape index: {}]
  %s2 = inlined_call_operand.hbm [shape: f32[384,512], index: 2, kind: output, shape index: {}]
  %s3 = sld [smem:[#allocation0]]
  $region49: #{tpu_custom_call.1} parent=0
    _
  %s5 = ssub.s32 1, %s3
  %s6 = scalar_select 0, %s5, %s3
  $region1: #{tpu_custom_call.1} parent=0
    #allocation2 [shape = 'u8[524288]{0}', space=vmem, size = 0x80000, scoped, tag = 'input window, operand 0']
    #allocation3 [shape = 's32[2]{0}', space=sflag, size = 0x8, scoped, tag = 'scoped memory for tpu_custom_call.1']
    #allocation4 [shape = 's32[2]{0}', space=sflag, size = 0x8, scoped, tag = 'scoped memory for tpu_custom_call.1']
    #allocation5 [shape = 'u8[131072]{0}', space=vmem, size = 0x20000, scoped, tag = 'input window, operand 1']
    #allocation6 [shape = 's32[2]{0}', space=sflag, size = 0x8, scoped, tag = 'scoped memory for tpu_custom_call.1']
    #allocation7 [shape = 'u8[524288]{0}', space=vmem, size = 0x80000, scoped, tag = 'output window, operand 0']
    %7 = vsyncpa [#allocation3], 0
    %s8 = scalar_lea.sflag [#allocation3], 1
    %9 = vsyncpa %s8, 0
    %10 = vsyncpa [#allocation6], 0
    %s11 = scalar_lea.sflag [#allocation6], 1
    %12 = vsyncpa %s11, 0
    %13 = vsyncpa [#allocation4], 0
    %s14 = scalar_lea.sflag [#allocation4], 1
    %15 = vsyncpa %s14, 0
    loop: start=0, step=1, limit=5
    $region2: #{tpu_custom_call.1} parent=1 // loop_pre_header
      _
    $region3: #{tpu_custom_call.1} parent=1 // loop_header
      %s17 = sphi 0, %s21
      %p18 = scmp.ge.s32.totalorder %s17, 5
      %s27 = sphi 0, %s29
      %s30 = sphi 0, %s27
      %s31 = sphi 0, %s30
      %s47 = sphi 0, %s31
      %s53 = sphi 0, %s55
      %s56 = sphi 0, %s53
      %s57 = sphi 0, %s56
      %s73 = sphi 0, %s57
      %s79 = sphi 0, %s81
      %s82 = sphi 0, %s79
      %s83 = sphi 0, %s82
      %s99 = sphi 0, %s83
    $region4: #{tpu_custom_call.1} parent=1 // loop_header_branch
      %20 = sbr.rel (%p18) target = $region8
    $region5: #{tpu_custom_call.1} parent=1 // loop_body
      %s22 = ssub.s32 %s17, 1
      %s23 = ssub.s32 %s17, 2
      %s24 = sadd.s32 %s17, 1
      %s25 = ssub.s32 %s17, %s24
      %p26 = scmp.eq.s32.totalorder %s25, 0
      %s28 = sadd.s32 %s27, 1
      %s29 = scalar_select %p26, %s27, %s28
      %p32 = pneg %p26
      %p33 = scmp.eq.s32.totalorder %s17, 2
      %p34 = por %p32, %p33
      %p35 = scmp.ne.s32.totalorder %s27, %s30
      %p36 = scmp.eq.s32.totalorder %s17, 0
      %p37 = por %p35, %p36
      %p38 = scmp.ne.s32.totalorder %s27, %s30
      %p39 = scmp.eq.s32.totalorder %s22, 2
      %p40 = por %p38, %p39
      %p41 = scmp.ne.s32.totalorder %s30, %s31
      %p42 = scmp.eq.s32.totalorder %s22, 0
      %p43 = por %p41, %p42
      %p44 = scmp.ne.s32.totalorder %s30, %s31
      %p45 = scmp.eq.s32.totalorder %s23, 2
      %p46 = por %p44, %p45
      %p48 = scmp.ne.s32.totalorder %s31, %s47
      %p49 = scmp.eq.s32.totalorder %s23, 0
      %p50 = por %p48, %p49
      %s51 = ssub.s32 %s17, %s24
      %p52 = scmp.eq.s32.totalorder %s51, 0
      %s54 = sadd.s32 %s53, 1
      %s55 = scalar_select %p52, %s53, %s54
      %p58 = pneg %p52
      %p59 = scmp.eq.s32.totalorder %s17, 2
      %p60 = por %p58, %p59
      %p61 = scmp.ne.s32.totalorder %s53, %s56
      %p62 = scmp.eq.s32.totalorder %s17, 0
      %p63 = por %p61, %p62
      %p64 = scmp.ne.s32.totalorder %s53, %s56
      %p65 = scmp.eq.s32.totalorder %s22, 2
      %p66 = por %p64, %p65
      %p67 = scmp.ne.s32.totalorder %s56, %s57
      %p68 = scmp.eq.s32.totalorder %s22, 0
      %p69 = por %p67, %p68
      %p70 = scmp.ne.s32.totalorder %s56, %s57
      %p71 = scmp.eq.s32.totalorder %s23, 2
      %p72 = por %p70, %p71
      %p74 = scmp.ne.s32.totalorder %s57, %s73
      %p75 = scmp.eq.s32.totalorder %s23, 0
      %p76 = por %p74, %p75
      %s77 = ssub.s32 %s17, %s24
      %p78 = scmp.eq.s32.totalorder %s77, 0
      %s80 = sadd.s32 %s79, 1
      %s81 = scalar_select %p78, %s79, %s80
      %p84 = pneg %p78
      %p85 = scmp.eq.s32.totalorder %s17, 2
      %p86 = por %p84, %p85
      %p87 = scmp.ne.s32.totalorder %s79, %s82
      %p88 = scmp.eq.s32.totalorder %s17, 0
      %p89 = por %p87, %p88
      %p90 = scmp.ne.s32.totalorder %s79, %s82
      %p91 = scmp.eq.s32.totalorder %s22, 2
      %p92 = por %p90, %p91
      %p93 = scmp.ne.s32.totalorder %s82, %s83
      %p94 = scmp.eq.s32.totalorder %s22, 0
      %p95 = por %p93, %p94
      %p96 = scmp.ne.s32.totalorder %s82, %s83
      %p97 = scmp.eq.s32.totalorder %s23, 2
      %p98 = por %p96, %p97
      %p100 = scmp.ne.s32.totalorder %s83, %s99
      %p101 = scmp.eq.s32.totalorder %s23, 0
      %p102 = por %p100, %p101
      %p103 = scmp.le.s32.totalorder 1, %s17
      %p104 = scmp.lt.s32.totalorder %s17, 4
      %p105 = pnand %p103, %p104
      %p106 = pneg %p105
      // Predicated region
      $region9: #{tpu_custom_call.1} parent=5 // pred_check
        _
      $region10: #{tpu_custom_call.1} parent=5 // pred_check_branch
        %108 = sbr.rel (%p105) target = $region12
      $region11: #{tpu_custom_call.1} parent=5 // pred_region
        %s109 = ssub.s32 %s17, 1
      $region12: #{tpu_custom_call.1} parent=5 // pred_fallthru
        _
      %p110 = scmp.lt.s32.totalorder %s17, 3
      // Predicated region
      $region13: #{tpu_custom_call.1} parent=5 // pred_check
        %p111 = pneg %p110
      $region14: #{tpu_custom_call.1} parent=5 // pred_check_branch
        %113 = sbr.rel (%p111) target = $region16
      $region15: #{tpu_custom_call.1} parent=5 // pred_region
        // Predicated region
        $region17: #{tpu_custom_call.1} parent=15 // pred_check
          %p114 = pneg %p37
        $region18: #{tpu_custom_call.1} parent=15 // pred_check_branch
          %116 = sbr.rel (%p114) target = $region20
        $region19: #{tpu_custom_call.1} parent=15 // pred_region
          %s117 = sand.u32 %s27, 1
          %s118 = scalar_lea.sflag [#allocation3], %s117
          %s119 = sand.u32 %s27, 1
          %s120 = smul.addr %s119, 512
          %s121 = scalar_lea.vmem [#allocation2], %s120
          %s122 = smul.u32 16, %s17
          %s124 = ssub.s32 8192, 8192
          %125 = vsyncadd %s118, %s124
          %s126 = smul.addr %s122, 4
          %s127 = smul.addr %s126, 128
          %s128 = scalar_lea.hbm %s0, %s127
          %s129 = sshll.u32 %s121, 4
          %s130 = int_to_ptr.vmem [resolvable:$true] %s129
          %135 = dma.hbm_to_vmem [thread:$0]  %s128, 8192, %s130, %s118, 512, 512, 32
        $region20: #{tpu_custom_call.1} parent=15 // pred_fallthru
          _
        // Predicated region
        $region21: #{tpu_custom_call.1} parent=15 // pred_check
          %p136 = pneg %p63
        $region22: #{tpu_custom_call.1} parent=15 // pred_check_branch
          %138 = sbr.rel (%p136) target = $region24
        $region23: #{tpu_custom_call.1} parent=15 // pred_region
          %s139 = sand.u32 %s53, 1
          %s140 = scalar_lea.sflag [#allocation6], %s139
          %s141 = sand.u32 %s53, 1
          %s142 = smul.addr %s141, 128
          %s143 = scalar_lea.vmem [#allocation5], %s142
          %s144 = smul.u32 16, %s17
          %s146 = ssub.s32 2048, 2048
          %147 = vsyncadd %s140, %s146
          %s148 = smul.addr %s144, 128
          %s149 = scalar_lea.hbm %s1, %s148
          %s150 = sshll.u32 %s143, 4
          %s151 = int_to_ptr.vmem [resolvable:$true] %s150
          %156 = dma.hbm_to_vmem [thread:$0]  %s149, 2048, %s151, %s140, 128, 128, 8
        $region24: #{tpu_custom_call.1} parent=15 // pred_fallthru
          _
      $region16: #{tpu_custom_call.1} parent=5 // pred_fallthru
        _
      %p157 = scmp.le.s32.totalorder 1, %s17
      %p158 = scmp.lt.s32.totalorder %s17, 4
      %p159 = pnand %p157, %p158
      %p160 = pneg %p159
      // Predicated region
      $region25: #{tpu_custom_call.1} parent=5 // pred_check
        _
      $region26: #{tpu_custom_call.1} parent=5 // pred_check_branch
        %162 = sbr.rel (%p159) target = $region28
      $region27: #{tpu_custom_call.1} parent=5 // pred_region
        %s163 = ssub.s32 %s17, 1
        %s164 = sand.u32 %s30, 1
        %s165 = scalar_lea.sflag [#allocation3], %s164
        %s166 = sand.u32 %s30, 1
        %s167 = smul.addr %s166, 512
        %s168 = scalar_lea.vmem [#allocation2], %s167
        // Predicated region
        $region29: #{tpu_custom_call.1} parent=27 // pred_check
          %p169 = pneg %p43
        $region30: #{tpu_custom_call.1} parent=27 // pred_check_branch
          %171 = sbr.rel (%p169) target = $region32
        $region31: #{tpu_custom_call.1} parent=27 // pred_region
          %172 = dma.done %s165, 8192
        $region32: #{tpu_custom_call.1} parent=27 // pred_fallthru
          _
        %s173 = sand.u32 %s56, 1
        %s174 = scalar_lea.sflag [#allocation6], %s173
        %s175 = sand.u32 %s56, 1
        %s176 = smul.addr %s175, 128
        %s177 = scalar_lea.vmem [#allocation5], %s176
        // Predicated region
        $region33: #{tpu_custom_call.1} parent=27 // pred_check
          %p178 = pneg %p69
        $region34: #{tpu_custom_call.1} parent=27 // pred_check_branch
          %180 = sbr.rel (%p178) target = $region36
        $region35: #{tpu_custom_call.1} parent=27 // pred_region
          %181 = dma.done %s174, 2048
        $region36: #{tpu_custom_call.1} parent=27 // pred_fallthru
          _
        %s182 = sand.u32 %s30, 1
        %s183 = scalar_lea.sflag [#allocation3], %s182
        %s184 = sand.u32 %s30, 1
        %s185 = smul.addr %s184, 512
        %s186 = scalar_lea.vmem [#allocation2], %s185
        %p187 = pneg %p43
        %p188 = pneg %p40
        %s189 = sand.u32 %s56, 1
        %s190 = scalar_lea.sflag [#allocation6], %s189
        %s191 = sand.u32 %s56, 1
        %s192 = smul.addr %s191, 128
        %s193 = scalar_lea.vmem [#allocation5], %s192
        %p194 = pneg %p69
        %p195 = pneg %p66
        %p196 = pneg %p95
        %p197 = pneg %p92
        %s198 = sand.u32 %s82, 1
        %s199 = scalar_lea.sflag [#allocation4], %s198
        %s200 = sand.u32 %s82, 1
        %s201 = smul.addr %s200, 512
        %s202 = scalar_lea.vmem [#allocation7], %s201
        %s203 = smul.u32 16, %s22
        %s204 = smul.u32 16, %s22
        %s205 = smul.u32 16, %s22
        %v206 = vld [vmem:[%s177] sm:$0xff]
        %v207 = vld [vmem:[%s177 + $0x8] sm:$0xff]
        %v208 = vld [vmem:[%s177 + $0x10] sm:$0xff]
        %v209 = vld [vmem:[%s177 + $0x18] sm:$0xff]
        %v210 = vld [vmem:[%s177 + $0x20] sm:$0xff]
        %v211 = vld [vmem:[%s177 + $0x28] sm:$0xff]
        %v212 = vld [vmem:[%s177 + $0x30] sm:$0xff]
        %v213 = vld [vmem:[%s177 + $0x38] sm:$0xff]
        %v214 = vld [vmem:[%s177 + $0x40] sm:$0xff]
        %v215 = vld [vmem:[%s177 + $0x48] sm:$0xff]
        %v216 = vld [vmem:[%s177 + $0x50] sm:$0xff]
        %v217 = vld [vmem:[%s177 + $0x58] sm:$0xff]
        %v218 = vld [vmem:[%s177 + $0x60] sm:$0xff]
        %v219 = vld [vmem:[%s177 + $0x68] sm:$0xff]
        %v220 = vld [vmem:[%s177 + $0x70] sm:$0xff]
        %v221 = vld [vmem:[%s177 + $0x78] sm:$0xff]
        %v222 = vld [vmem:[%s168] sm:$0xff]
        %v223 = vld [vmem:[%s168 + $0x8] sm:$0xff]
        %v224 = vld [vmem:[%s168 + $0x10] sm:$0xff]
        %v225 = vld [vmem:[%s168 + $0x18] sm:$0xff]
        %v226 = vld [vmem:[%s168 + $0x20] sm:$0xff]
        %v227 = vld [vmem:[%s168 + $0x28] sm:$0xff]
        %v228 = vld [vmem:[%s168 + $0x30] sm:$0xff]
        %v229 = vld [vmem:[%s168 + $0x38] sm:$0xff]
        %v230 = vld [vmem:[%s168 + $0x40] sm:$0xff]
        %v231 = vld [vmem:[%s168 + $0x48] sm:$0xff]
        %v232 = vld [vmem:[%s168 + $0x50] sm:$0xff]
        %v233 = vld [vmem:[%s168 + $0x58] sm:$0xff]
        %v234 = vld [vmem:[%s168 + $0x60] sm:$0xff]
        %v235 = vld [vmem:[%s168 + $0x68] sm:$0xff]
        %v236 = vld [vmem:[%s168 + $0x70] sm:$0xff]
        %v237 = vld [vmem:[%s168 + $0x78] sm:$0xff]
        %v238 = vld [vmem:[%s168 + $0x80] sm:$0xff]
        %v239 = vld [vmem:[%s168 + $0x88] sm:$0xff]
        %v240 = vld [vmem:[%s168 + $0x90] sm:$0xff]
        %v241 = vld [vmem:[%s168 + $0x98] sm:$0xff]
        %v242 = vld [vmem:[%s168 + $0xa0] sm:$0xff]
        %v243 = vld [vmem:[%s168 + $0xa8] sm:$0xff]
        %v244 = vld [vmem:[%s168 + $0xb0] sm:$0xff]
        %v245 = vld [vmem:[%s168 + $0xb8] sm:$0xff]
        %v246 = vld [vmem:[%s168 + $0xc0] sm:$0xff]
        %v247 = vld [vmem:[%s168 + $0xc8] sm:$0xff]
        %v248 = vld [vmem:[%s168 + $0xd0] sm:$0xff]
        %v249 = vld [vmem:[%s168 + $0xd8] sm:$0xff]
        %v250 = vld [vmem:[%s168 + $0xe0] sm:$0xff]
        %v251 = vld [vmem:[%s168 + $0xe8] sm:$0xff]
        %v252 = vld [vmem:[%s168 + $0xf0] sm:$0xff]
        %v253 = vld [vmem:[%s168 + $0xf8] sm:$0xff]
        %v254 = vld [vmem:[%s168 + $0x100] sm:$0xff]
        %v255 = vld [vmem:[%s168 + $0x108] sm:$0xff]
        %v256 = vld [vmem:[%s168 + $0x110] sm:$0xff]
        %v257 = vld [vmem:[%s168 + $0x118] sm:$0xff]
        %v258 = vld [vmem:[%s168 + $0x120] sm:$0xff]
        %v259 = vld [vmem:[%s168 + $0x128] sm:$0xff]
        %v260 = vld [vmem:[%s168 + $0x130] sm:$0xff]
        %v261 = vld [vmem:[%s168 + $0x138] sm:$0xff]
        %v262 = vld [vmem:[%s168 + $0x140] sm:$0xff]
        %v263 = vld [vmem:[%s168 + $0x148] sm:$0xff]
        %v264 = vld [vmem:[%s168 + $0x150] sm:$0xff]
        %v265 = vld [vmem:[%s168 + $0x158] sm:$0xff]
        %v266 = vld [vmem:[%s168 + $0x160] sm:$0xff]
        %v267 = vld [vmem:[%s168 + $0x168] sm:$0xff]
        %v268 = vld [vmem:[%s168 + $0x170] sm:$0xff]
        %v269 = vld [vmem:[%s168 + $0x178] sm:$0xff]
        %v270 = vld [vmem:[%s168 + $0x180] sm:$0xff]
        %v271 = vld [vmem:[%s168 + $0x188] sm:$0xff]
        %v272 = vld [vmem:[%s168 + $0x190] sm:$0xff]
        %v273 = vld [vmem:[%s168 + $0x198] sm:$0xff]
        %v274 = vld [vmem:[%s168 + $0x1a0] sm:$0xff]
        %v275 = vld [vmem:[%s168 + $0x1a8] sm:$0xff]
        %v276 = vld [vmem:[%s168 + $0x1b0] sm:$0xff]
        %v277 = vld [vmem:[%s168 + $0x1b8] sm:$0xff]
        %v278 = vld [vmem:[%s168 + $0x1c0] sm:$0xff]
        %v279 = vld [vmem:[%s168 + $0x1c8] sm:$0xff]
        %v280 = vld [vmem:[%s168 + $0x1d0] sm:$0xff]
        %v281 = vld [vmem:[%s168 + $0x1d8] sm:$0xff]
        %v282 = vld [vmem:[%s168 + $0x1e0] sm:$0xff]
        %v283 = vld [vmem:[%s168 + $0x1e8] sm:$0xff]
        %v284 = vld [vmem:[%s168 + $0x1f0] sm:$0xff]
        %v285 = vld [vmem:[%s168 + $0x1f8] sm:$0xff]
        %v286 = vadd.f32 %v222, %v206
        %v287 = vadd.f32 %v223, %v206
        %v288 = vadd.f32 %v224, %v206
        %v289 = vadd.f32 %v225, %v206
        %v290 = vadd.f32 %v226, %v207
        %v291 = vadd.f32 %v227, %v207
        %v292 = vadd.f32 %v228, %v207
        %v293 = vadd.f32 %v229, %v207
        %v294 = vadd.f32 %v230, %v208
        %v295 = vadd.f32 %v231, %v208
        %v296 = vadd.f32 %v232, %v208
        %v297 = vadd.f32 %v233, %v208
        %v298 = vadd.f32 %v234, %v209
        %v299 = vadd.f32 %v235, %v209
        %v300 = vadd.f32 %v236, %v209
        %v301 = vadd.f32 %v237, %v209
        %v302 = vadd.f32 %v238, %v210
        %v303 = vadd.f32 %v239, %v210
        %v304 = vadd.f32 %v240, %v210
        %v305 = vadd.f32 %v241, %v210
        %v306 = vadd.f32 %v242, %v211
        %v307 = vadd.f32 %v243, %v211
        %v308 = vadd.f32 %v244, %v211
        %v309 = vadd.f32 %v245, %v211
        %v310 = vadd.f32 %v246, %v212
        %v311 = vadd.f32 %v247, %v212
        %v312 = vadd.f32 %v248, %v212
        %v313 = vadd.f32 %v249, %v212
        %v314 = vadd.f32 %v250, %v213
        %v315 = vadd.f32 %v251, %v213
        %v316 = vadd.f32 %v252, %v213
        %v317 = vadd.f32 %v253, %v213
        %v318 = vadd.f32 %v254, %v214
        %v319 = vadd.f32 %v255, %v214
        %v320 = vadd.f32 %v256, %v214
        %v321 = vadd.f32 %v257, %v214
        %v322 = vadd.f32 %v258, %v215
        %v323 = vadd.f32 %v259, %v215
        %v324 = vadd.f32 %v260, %v215
        %v325 = vadd.f32 %v261, %v215
        %v326 = vadd.f32 %v262, %v216
        %v327 = vadd.f32 %v263, %v216
        %v328 = vadd.f32 %v264, %v216
        %v329 = vadd.f32 %v265, %v216
        %v330 = vadd.f32 %v266, %v217
        %v331 = vadd.f32 %v267, %v217
        %v332 = vadd.f32 %v268, %v217
        %v333 = vadd.f32 %v269, %v217
        %v334 = vadd.f32 %v270, %v218
        %v335 = vadd.f32 %v271, %v218
        %v336 = vadd.f32 %v272, %v218
        %v337 = vadd.f32 %v273, %v218
        %v338 = vadd.f32 %v274, %v219
        %v339 = vadd.f32 %v275, %v219
        %v340 = vadd.f32 %v276, %v219
        %v341 = vadd.f32 %v277, %v219
        %v342 = vadd.f32 %v278, %v220
        %v343 = vadd.f32 %v279, %v220
        %v344 = vadd.f32 %v280, %v220
        %v345 = vadd.f32 %v281, %v220
        %v346 = vadd.f32 %v282, %v221
        %v347 = vadd.f32 %v283, %v221
        %v348 = vadd.f32 %v284, %v221
        %v349 = vadd.f32 %v285, %v221
        %350 = vst [vmem:[%s202] sm:$0xff] %v286
        %351 = vst [vmem:[%s202 + $0x8] sm:$0xff] %v287
        %352 = vst [vmem:[%s202 + $0x10] sm:$0xff] %v288
        %353 = vst [vmem:[%s202 + $0x18] sm:$0xff] %v289
        %354 = vst [vmem:[%s202 + $0x20] sm:$0xff] %v290
        %355 = vst [vmem:[%s202 + $0x28] sm:$0xff] %v291
        %356 = vst [vmem:[%s202 + $0x30] sm:$0xff] %v292
        %357 = vst [vmem:[%s202 + $0x38] sm:$0xff] %v293
        %358 = vst [vmem:[%s202 + $0x40] sm:$0xff] %v294
        %359 = vst [vmem:[%s202 + $0x48] sm:$0xff] %v295
        %360 = vst [vmem:[%s202 + $0x50] sm:$0xff] %v296
        %361 = vst [vmem:[%s202 + $0x58] sm:$0xff] %v297
        %362 = vst [vmem:[%s202 + $0x60] sm:$0xff] %v298
        %363 = vst [vmem:[%s202 + $0x68] sm:$0xff] %v299
        %364 = vst [vmem:[%s202 + $0x70] sm:$0xff] %v300
        %365 = vst [vmem:[%s202 + $0x78] sm:$0xff] %v301
        %366 = vst [vmem:[%s202 + $0x80] sm:$0xff] %v302
        %367 = vst [vmem:[%s202 + $0x88] sm:$0xff] %v303
        %368 = vst [vmem:[%s202 + $0x90] sm:$0xff] %v304
        %369 = vst [vmem:[%s202 + $0x98] sm:$0xff] %v305
        %370 = vst [vmem:[%s202 + $0xa0] sm:$0xff] %v306
        %371 = vst [vmem:[%s202 + $0xa8] sm:$0xff] %v307
        %372 = vst [vmem:[%s202 + $0xb0] sm:$0xff] %v308
        %373 = vst [vmem:[%s202 + $0xb8] sm:$0xff] %v309
        %374 = vst [vmem:[%s202 + $0xc0] sm:$0xff] %v310
        %375 = vst [vmem:[%s202 + $0xc8] sm:$0xff] %v311
        %376 = vst [vmem:[%s202 + $0xd0] sm:$0xff] %v312
        %377 = vst [vmem:[%s202 + $0xd8] sm:$0xff] %v313
        %378 = vst [vmem:[%s202 + $0xe0] sm:$0xff] %v314
        %379 = vst [vmem:[%s202 + $0xe8] sm:$0xff] %v315
        %380 = vst [vmem:[%s202 + $0xf0] sm:$0xff] %v316
        %381 = vst [vmem:[%s202 + $0xf8] sm:$0xff] %v317
        %382 = vst [vmem:[%s202 + $0x100] sm:$0xff] %v318
        %383 = vst [vmem:[%s202 + $0x108] sm:$0xff] %v319
        %384 = vst [vmem:[%s202 + $0x110] sm:$0xff] %v320
        %385 = vst [vmem:[%s202 + $0x118] sm:$0xff] %v321
        %386 = vst [vmem:[%s202 + $0x120] sm:$0xff] %v322
        %387 = vst [vmem:[%s202 + $0x128] sm:$0xff] %v323
        %388 = vst [vmem:[%s202 + $0x130] sm:$0xff] %v324
        %389 = vst [vmem:[%s202 + $0x138] sm:$0xff] %v325
        %390 = vst [vmem:[%s202 + $0x140] sm:$0xff] %v326
        %391 = vst [vmem:[%s202 + $0x148] sm:$0xff] %v327
        %392 = vst [vmem:[%s202 + $0x150] sm:$0xff] %v328
        %393 = vst [vmem:[%s202 + $0x158] sm:$0xff] %v329
        %394 = vst [vmem:[%s202 + $0x160] sm:$0xff] %v330
        %395 = vst [vmem:[%s202 + $0x168] sm:$0xff] %v331
        %396 = vst [vmem:[%s202 + $0x170] sm:$0xff] %v332
        %397 = vst [vmem:[%s202 + $0x178] sm:$0xff] %v333
        %398 = vst [vmem:[%s202 + $0x180] sm:$0xff] %v334
        %399 = vst [vmem:[%s202 + $0x188] sm:$0xff] %v335
        %400 = vst [vmem:[%s202 + $0x190] sm:$0xff] %v336
        %401 = vst [vmem:[%s202 + $0x198] sm:$0xff] %v337
        %402 = vst [vmem:[%s202 + $0x1a0] sm:$0xff] %v338
        %403 = vst [vmem:[%s202 + $0x1a8] sm:$0xff] %v339
        %404 = vst [vmem:[%s202 + $0x1b0] sm:$0xff] %v340
        %405 = vst [vmem:[%s202 + $0x1b8] sm:$0xff] %v341
        %406 = vst [vmem:[%s202 + $0x1c0] sm:$0xff] %v342
        %407 = vst [vmem:[%s202 + $0x1c8] sm:$0xff] %v343
        %408 = vst [vmem:[%s202 + $0x1d0] sm:$0xff] %v344
        %409 = vst [vmem:[%s202 + $0x1d8] sm:$0xff] %v345
        %410 = vst [vmem:[%s202 + $0x1e0] sm:$0xff] %v346
        %411 = vst [vmem:[%s202 + $0x1e8] sm:$0xff] %v347
        %412 = vst [vmem:[%s202 + $0x1f0] sm:$0xff] %v348
        %413 = vst [vmem:[%s202 + $0x1f8] sm:$0xff] %v349
        %s414 = sand.u32 %s82, 1
        %s415 = scalar_lea.sflag [#allocation4], %s414
        %s416 = sand.u32 %s82, 1
        %s417 = smul.addr %s416, 512
        %s418 = scalar_lea.vmem [#allocation7], %s417
        // Predicated region
        $region37: #{tpu_custom_call.1} parent=27 // pred_check
          %p419 = pneg %p92
        $region38: #{tpu_custom_call.1} parent=27 // pred_check_branch
          %421 = sbr.rel (%p419) target = $region40
        $region39: #{tpu_custom_call.1} parent=27 // pred_region
          %s422 = smul.u32 16, %s22
          %s424 = ssub.s32 8192, 8192
          %425 = vsyncadd %s415, %s424
          %s426 = smul.addr %s422, 4
          %s427 = smul.addr %s426, 128
          %s428 = scalar_lea.hbm %s2, %s427
          %s429 = sshll.u32 %s418, 4
          %s430 = int_to_ptr.vmem [resolvable:$true] %s429
          %435 = dma.vmem_to_hbm [thread:$0]  %s430, 8192, %s428, %s415, 512, 512, 32
        $region40: #{tpu_custom_call.1} parent=27 // pred_fallthru
          _
      $region28: #{tpu_custom_call.1} parent=5 // pred_fallthru
        _
      %p436 = scmp.le.s32.totalorder 2, %s17
      // Predicated region
      $region41: #{tpu_custom_call.1} parent=5 // pred_check
        %p437 = pneg %p436
      $region42: #{tpu_custom_call.1} parent=5 // pred_check_branch
        %439 = sbr.rel (%p437) target = $region44
      $region43: #{tpu_custom_call.1} parent=5 // pred_region
        %s440 = ssub.s32 %s17, 2
        // Predicated region
        $region45: #{tpu_custom_call.1} parent=43 // pred_check
          %p441 = pneg %p98
        $region46: #{tpu_custom_call.1} parent=43 // pred_check_branch
          %443 = sbr.rel (%p441) target = $region48
        $region47: #{tpu_custom_call.1} parent=43 // pred_region
          %s444 = sand.u32 %s83, 1
          %s445 = scalar_lea.sflag [#allocation4], %s444
          %s446 = sand.u32 %s83, 1
          %s447 = smul.addr %s446, 512
          %s448 = scalar_lea.vmem [#allocation7], %s447
          %449 = dma.done %s445, 8192
        $region48: #{tpu_custom_call.1} parent=43 // pred_fallthru
          _
      $region44: #{tpu_custom_call.1} parent=5 // pred_fallthru
        _
    $region6: #{tpu_custom_call.1} parent=1 // loop_footer
      %s21 = sadd.s32 1, %s17
    $region7: #{tpu_custom_call.1} parent=1 // loop_footer_branch
      %16 = sbr.rel target = $region3
    $region8: #{tpu_custom_call.1} parent=1 // loop_exit
      _
    %450 = vsyncpa [#allocation3], 1
    %s451 = scalar_lea.sflag [#allocation3], 1
    %452 = vsyncpa %s451, 1
    %453 = vsyncpa [#allocation6], 1
    %s454 = scalar_lea.sflag [#allocation6], 1
    %455 = vsyncpa %s454, 1
    %456 = vsyncpa [#allocation4], 1
    %s457 = scalar_lea.sflag [#allocation4], 1
    %458 = vsyncpa %s457, 1

</llo_original>
